<compile_context>
chip_gen: v7x
topology: tpu7x:2x2x1
jax: 0.10.0
libtpu: 0.0.40
codegen_flags: <defaults>
</compile_context>

<pallas_src>
import math
import jax
import jax.numpy as jnp
from jax.experimental import pallas as pl
from jax.experimental.pallas import tpu as pltpu


def _gelu_erf(x):
    # exact erf-based GELU, matching the reference `gelu` function
    return 0.5 * x * (1.0 + jax.lax.erf(x / math.sqrt(2.0)))


def _round_up(n, m):
    return ((n + m - 1) // m) * m


def ffn_kernel(x_ref, w1_ref, b1_ref, w2_ref, b2_ref, o_ref, acc_ref):
    # grid = (token_tiles, hidden_chunks); hidden is the reduction axis (last).
    # x_ref:  (tile_m, in_pad)     bf16
    # w1_ref: (in_pad, tile_h)     bf16      b1_ref: (1, tile_h)  f32
    # w2_ref: (tile_h, out_pad)    bf16      b2_ref: (1, out_pad) f32
    # o_ref:  (tile_m, out_pad)    f32       acc_ref: VMEM f32 accumulator
    k = pl.program_id(1)

    @pl.when(k == 0)
    def _init():
        # Fold the second bias into the accumulator init (once per token tile)
        # instead of re-broadcasting it on every hidden chunk.
        acc_ref[...] = jnp.broadcast_to(
            b2_ref[...].astype(jnp.float32), acc_ref.shape)

    # bf16 MXU matmul, f32 accumulation; bias + GELU in f32.
    h = jnp.dot(x_ref[...], w1_ref[...], preferred_element_type=jnp.float32)
    h = _gelu_erf(h + b1_ref[...].astype(jnp.float32))
    acc_ref[...] += jnp.dot(h.astype(w2_ref.dtype), w2_ref[...],
                            preferred_element_type=jnp.float32)

    @pl.when(k == pl.num_programs(1) - 1)
    def _store():
        o_ref[...] = acc_ref[...].astype(o_ref.dtype)


def _vmem_estimate_bytes(tile_m, in_pad, tile_h, out_pad, mdt_bytes):
    # double-buffered inputs/outputs + f32 accumulator
    return (2 * tile_m * in_pad * mdt_bytes      # x tiles
            + 2 * in_pad * tile_h * mdt_bytes    # w1 chunks
            + 2 * tile_h * 4                     # b1 chunks
            + 2 * tile_h * out_pad * mdt_bytes   # w2 chunks
            + 2 * out_pad * 4                    # b2
            + 2 * tile_m * out_pad * 4           # output tiles
            + tile_m * out_pad * 4)              # accumulator


def transformer_ffn(x, w1, b1, w2, b2, *, tile_m=256, hidden_chunk=512,
                    matmul_dtype=jnp.bfloat16):
    """Fused FFN: gelu(x @ w1 + b1) @ w2 + b2 (eval-mode dropout = identity).

    x:  (..., in_dim) float32
    w1: (in_dim, hidden)   b1: (hidden,)
    w2: (hidden, out_dim)  b2: (out_dim,)
    """
    orig_shape = x.shape
    in_dim = orig_shape[-1]
    hidden = w1.shape[1]
    out_dim = w2.shape[1]

    x2d = x.reshape(-1, in_dim)
    T = x2d.shape[0]

    b1 = b1.reshape(1, hidden).astype(jnp.float32)
    b2 = b2.reshape(1, out_dim).astype(jnp.float32)

    # --- tiling / padding decisions -------------------------------------
    # token tile: large for MXU row utilization, but no bigger than T needs
    tile_m = max(8, min(tile_m, _round_up(T, 8)))
    t_pad = _round_up(T, tile_m)
    # feature dims lane-dense (multiples of 128); hidden chunked for streaming
    in_pad = _round_up(in_dim, 128)
    out_pad = _round_up(out_dim, 128)
    tile_h = _round_up(min(hidden_chunk, _round_up(hidden, 128)), 128)
    hid_pad = _round_up(hidden, tile_h)

    mdt_bytes = jnp.dtype(matmul_dtype).itemsize
    xp = jnp.pad(x2d.astype(matmul_dtype),
                 ((0, t_pad - T), (0, in_pad - in_dim)))
    w1p = jnp.pad(w1.astype(matmul_dtype),
                  ((0, in_pad - in_dim), (0, hid_pad - hidden)))
    b1p = jnp.pad(b1, ((0, 0), (0, hid_pad - hidden)))
    w2p = jnp.pad(w2.astype(matmul_dtype),
                  ((0, hid_pad - hidden), (0, out_pad - out_dim)))
    b2p = jnp.pad(b2, ((0, 0), (0, out_pad - out_dim)))

    grid = (t_pad // tile_m, hid_pad // tile_h)

    # raise scoped VMEM only when the pipeline actually needs it (v5e default
    # is 16 MiB); cap well under v7x's 64 MiB physical VMEM.
    est = _vmem_estimate_bytes(tile_m, in_pad, tile_h, out_pad, mdt_bytes)
    cp_kwargs = dict(dimension_semantics=("parallel", "arbitrary"))
    if est > 24 * 1024 * 1024:
        cp_kwargs["vmem_limit_bytes"] = int(
            min(max(2 * est, 32 * 1024 * 1024), 60 * 1024 * 1024))

    out = pl.pallas_call(
        ffn_kernel,
        out_shape=jax.ShapeDtypeStruct((t_pad, out_pad), x.dtype),
        grid=grid,
        in_specs=[
            pl.BlockSpec((tile_m, in_pad), lambda i, k: (i, 0)),
            pl.BlockSpec((in_pad, tile_h), lambda i, k: (0, k)),
            pl.BlockSpec((1, tile_h), lambda i, k: (0, k)),
            pl.BlockSpec((tile_h, out_pad), lambda i, k: (k, 0)),
            pl.BlockSpec((1, out_pad), lambda i, k: (0, 0)),
        ],
        out_specs=pl.BlockSpec((tile_m, out_pad), lambda i, k: (i, 0)),
        scratch_shapes=[pltpu.VMEM((tile_m, out_pad), jnp.float32)],
        compiler_params=pltpu.CompilerParams(**cp_kwargs),
    )(xp, w1p, b1p, w2p, b2p)

    # strip padding, restore leading dims
    return out[:T, :out_dim].reshape(*orig_shape[:-1], out_dim)


if __name__ == "__main__":
    # small shapes implied by the module: batch=2, seq=8, in_dim=32,
    # dim_hidden=64, out_dim=32, dropout=0.1, gelu_activation=True
    batch, seq = 2, 8
    in_dim, dim_hidden, out_dim = 32, 64, 32

    key = jax.random.PRNGKey(0)
    k_x, k_w1, k_b1, k_w2, k_b2 = jax.random.split(key, 5)

    # deterministic parameter init (nn.Linear-style uniform bounds)
    lim1 = 1.0 / math.sqrt(in_dim)
    lim2 = 1.0 / math.sqrt(dim_hidden)
    w1 = jax.random.uniform(k_w1, (in_dim, dim_hidden), jnp.float32, -lim1, lim1)
    b1 = jax.random.uniform(k_b1, (dim_hidden,), jnp.float32, -lim1, lim1)
    w2 = jax.random.uniform(k_w2, (dim_hidden, out_dim), jnp.float32, -lim2, lim2)
    b2 = jax.random.uniform(k_b2, (out_dim,), jnp.float32, -lim2, lim2)

    x = jax.random.normal(k_x, (batch, seq, in_dim), jnp.float32)

    y = transformer_ffn(x, w1, b1, w2, b2)
    jax.block_until_ready(y)
    assert y.shape == (batch, seq, out_dim)

    # reference with the same bf16-matmul / f32-accumulate scheme as the kernel
    mdt = jnp.bfloat16
    x2d = x.reshape(-1, in_dim)
    h_ref = jnp.dot(x2d.astype(mdt), w1.astype(mdt),
                    preferred_element_type=jnp.float32) + b1
    h_ref = _gelu_erf(h_ref)
    y_ref = (jnp.dot(h_ref.astype(mdt), w2.astype(mdt),
                     preferred_element_type=jnp.float32) + b2
             ).reshape(batch, seq, out_dim)
    assert jnp.allclose(y, y_ref, atol=5e-3, rtol=5e-3), "mismatch vs bf16 reference"

    # loose sanity check against pure-f32 math (bounds the bf16 matmul error)
    y_f32 = (_gelu_erf(x2d @ w1 + b1) @ w2 + b2).reshape(batch, seq, out_dim)
    assert jnp.allclose(y, y_f32, atol=5e-2, rtol=5e-2), "drifted from f32 math"

    print("KERNEL_OK")
</pallas_src>

<mosaic_0001>
module attributes {stable_mosaic.version = 11 : i64} {
  func.func @ffn_kernel(%arg0: i32, %arg1: i32, %arg2: memref<16x128xbf16, #tpu.memory_space<vmem>>, %arg3: memref<128x128xbf16, #tpu.memory_space<vmem>>, %arg4: memref<1x128xf32, #tpu.memory_space<vmem>>, %arg5: memref<128x128xbf16, #tpu.memory_space<vmem>>, %arg6: memref<1x128xf32, #tpu.memory_space<vmem>>, %arg7: memref<16x128xf32, #tpu.memory_space<vmem>>, %arg8: memref<16x128xf32, #tpu.memory_space<vmem>>) attributes {dimension_semantics = [#tpu.dimension_semantics<parallel>, #tpu.dimension_semantics<arbitrary>], iteration_bounds = array<i64: 1, 1>, scalar_prefetch = 0 : i64, scratch_operands = 1 : i64, tpu.core_type = #tpu.core_type<tc>, window_params = [{transform_indices = @transform_0, window_bounds = array<i64: 16, 128>}, {transform_indices = @transform_1, window_bounds = array<i64: 128, 128>}, {transform_indices = @transform_2, window_bounds = array<i64: 1, 128>}, {transform_indices = @transform_3, window_bounds = array<i64: 128, 128>}, {pipeline_mode = #tpu.pipeline_mode<synchronous>, transform_indices = @transform_4, window_bounds = array<i64: 1, 128>}, {transform_indices = @transform_5, window_bounds = array<i64: 16, 128>}]} {
    %c0_i32 = arith.constant 0 : i32
    %0 = arith.cmpi eq, %arg1, %c0_i32 : i32
    %1 = arith.extui %0 : i1 to i32
    %c0_i32_0 = arith.constant 0 : i32
    %2 = arith.cmpi ne, %1, %c0_i32_0 : i32
    scf.if %2 {
      %c0_18 = arith.constant 0 : index
      %c0_19 = arith.constant 0 : index
      %26 = vector.load %arg6[%c0_18, %c0_19] : memref<1x128xf32, #tpu.memory_space<vmem>>, vector<1x128xf32>
      %27 = vector.shape_cast %26 : vector<1x128xf32> to vector<1x128xf32>
      %28 = vector.broadcast %27 : vector<1x128xf32> to vector<16x128xf32>
      %c0_20 = arith.constant 0 : index
      %c0_21 = arith.constant 0 : index
      %29 = vector.load %arg8[%c0_20, %c0_21] : memref<16x128xf32, #tpu.memory_space<vmem>>, vector<16x128xf32>
      tpu.vector_store %arg8[%c0_20, %c0_21], %28 {strides = array<i32>} : memref<16x128xf32, #tpu.memory_space<vmem>>, vector<16x128xf32>,
    } else {
    }
    %c0 = arith.constant 0 : index
    %c0_1 = arith.constant 0 : index
    %3 = vector.load %arg2[%c0, %c0_1] : memref<16x128xbf16, #tpu.memory_space<vmem>>, vector<16x128xbf16>
    %c0_2 = arith.constant 0 : index
    %c0_3 = arith.constant 0 : index
    %4 = vector.load %arg3[%c0_2, %c0_3] : memref<128x128xbf16, #tpu.memory_space<vmem>>, vector<128x128xbf16>
    %cst = arith.constant dense<0.000000e+00> : vector<16x128xf32>
    %5 = tpu.matmul %3, %4, %cst {dimension_numbers = #tpu.dot_dimension_numbers<[1], [0], [0], [1], [0, 0, 1, 1], [], []>} : vector<16x128xbf16>, vector<128x128xbf16>, vector<16x128xf32> -> vector<16x128xf32>
    %c0_4 = arith.constant 0 : index
    %c0_5 = arith.constant 0 : index
    %6 = vector.load %arg4[%c0_4, %c0_5] : memref<1x128xf32, #tpu.memory_space<vmem>>, vector<1x128xf32>
    %7 = vector.broadcast %6 : vector<1x128xf32> to vector<16x128xf32>
    %8 = arith.addf %5, %7 : vector<16x128xf32>
    %cst_6 = arith.constant 5.000000e-01 : f32
    %9 = vector.broadcast %cst_6 : f32 to vector<16x128xf32>
    %10 = arith.mulf %9, %8 : vector<16x128xf32>
    %cst_7 = arith.constant 1.41421354 : f32
    %11 = vector.broadcast %cst_7 : f32 to vector<16x128xf32>
    %12 = arith.divf %8, %11 : vector<16x128xf32>
    %13 = math.erf %12 : vector<16x128xf32>
    %cst_8 = arith.constant 1.000000e+00 : f32
    %14 = vector.broadcast %cst_8 : f32 to vector<16x128xf32>
    %15 = arith.addf %14, %13 : vector<16x128xf32>
    %16 = arith.mulf %10, %15 : vector<16x128xf32>
    %c0_9 = arith.constant 0 : index
    %c0_10 = arith.constant 0 : index
    %17 = vector.load %arg8[%c0_9, %c0_10] : memref<16x128xf32, #tpu.memory_space<vmem>>, vector<16x128xf32>
    %18 = arith.truncf %16 : vector<16x128xf32> to vector<16x128xbf16>
    %c0_11 = arith.constant 0 : index
    %c0_12 = arith.constant 0 : index
    %19 = vector.load %arg5[%c0_11, %c0_12] : memref<128x128xbf16, #tpu.memory_space<vmem>>, vector<128x128xbf16>
    %cst_13 = arith.constant dense<0.000000e+00> : vector<16x128xf32>
    %20 = tpu.matmul %18, %19, %cst_13 {dimension_numbers = #tpu.dot_dimension_numbers<[1], [0], [0], [1], [0, 0, 1, 1], [], []>} : vector<16x128xbf16>, vector<128x128xbf16>, vector<16x128xf32> -> vector<16x128xf32>
    %21 = arith.addf %17, %20 : vector<16x128xf32>
    %c0_14 = arith.constant 0 : index
    %c0_15 = arith.constant 0 : index
    %22 = vector.load %arg8[%c0_14, %c0_15] : memref<16x128xf32, #tpu.memory_space<vmem>>, vector<16x128xf32>
    tpu.vector_store %arg8[%c0_14, %c0_15], %21 {strides = array<i32>} : memref<16x128xf32, #tpu.memory_space<vmem>>, vector<16x128xf32>,
    %c0_i32_16 = arith.constant 0 : i32
    %23 = arith.cmpi eq, %arg1, %c0_i32_16 : i32
    %24 = arith.extui %23 : i1 to i32
    %c0_i32_17 = arith.constant 0 : i32
    %25 = arith.cmpi ne, %24, %c0_i32_17 : i32
    scf.if %25 {
      %c0_18 = arith.constant 0 : index
      %c0_19 = arith.constant 0 : index
      %26 = vector.load %arg8[%c0_18, %c0_19] : memref<16x128xf32, #tpu.memory_space<vmem>>, vector<16x128xf32>
      %c0_20 = arith.constant 0 : index
      %c0_21 = arith.constant 0 : index
      %27 = vector.load %arg7[%c0_20, %c0_21] : memref<16x128xf32, #tpu.memory_space<vmem>>, vector<16x128xf32>
      tpu.vector_store %arg7[%c0_20, %c0_21], %26 {strides = array<i32>} : memref<16x128xf32, #tpu.memory_space<vmem>>, vector<16x128xf32>,
    } else {
    }
    return
  }
  func.func @transform_0(%arg0: i32, %arg1: i32) -> (i32, i32) {
    %c0_i32 = arith.constant 0 : i32
    %c0_i32_0 = arith.constant 0 : i32
    return %arg0, %c0_i32 : i32, i32
  }
  func.func @transform_1(%arg0: i32, %arg1: i32) -> (i32, i32) {
    %c0_i32 = arith.constant 0 : i32
    %c0_i32_0 = arith.constant 0 : i32
    return %c0_i32, %arg1 : i32, i32
  }
  func.func @transform_2(%arg0: i32, %arg1: i32) -> (i32, i32) {
    %c0_i32 = arith.constant 0 : i32
    %c0_i32_0 = arith.constant 0 : i32
    return %c0_i32, %arg1 : i32, i32
  }
  func.func @transform_3(%arg0: i32, %arg1: i32) -> (i32, i32) {
    %c0_i32 = arith.constant 0 : i32
    %c0_i32_0 = arith.constant 0 : i32
    return %arg1, %c0_i32 : i32, i32
  }
  func.func @transform_4(%arg0: i32, %arg1: i32) -> (i32, i32) {
    %c0_i32 = arith.constant 0 : i32
    %c0_i32_0 = arith.constant 0 : i32
    %c0_i32_1 = arith.constant 0 : i32
    return %c0_i32, %c0_i32_0 : i32, i32
  }
  func.func @transform_5(%arg0: i32, %arg1: i32) -> (i32, i32) {
    %c0_i32 = arith.constant 0 : i32
    %c0_i32_0 = arith.constant 0 : i32
    return %arg0, %c0_i32 : i32, i32
  }
}

</mosaic_0001>

<llo_original>
// kernel: tpu_custom_call.1
$region0: #{tpu_custom_call.1}
  #allocation0 [shape = 'u32[]', space=smem, size = 0x4, offset = 0x4, fixed_abs, tag = 'smem constant byte address 0x4 - core index']
  #allocation1 [shape = 'u32[144,128]{1,0:T(1,128)}', space=vmem, size = 0x12000, scoped, tag = 'internal scratch']
  #allocation2 [shape = 'f32[16,128]{1,0:T(8,128)}', space=vmem, size = 0x2000, scoped, tag = 'scratch operand']
  %s0 = inlined_call_operand.hbm [shape: bf16[16,128], index: 0, kind: input, shape index: {}]
  %s1 = inlined_call_operand.hbm [shape: bf16[128,128], index: 1, kind: input, shape index: {}]
  %s2 = inlined_call_operand.vmem [shape: f32[1,128], index: 2, kind: input, shape index: {}]
  %s3 = inlined_call_operand.hbm [shape: bf16[128,128], index: 3, kind: input, shape index: {}]
  %s4 = inlined_call_operand.vmem [shape: f32[1,128], index: 4, kind: input, shape index: {}]
  %s5 = inlined_call_operand.hbm [shape: f32[16,128], index: 5, kind: output, shape index: {}]
  %s6 = sld [smem:[#allocation0]]
  $region50: #{tpu_custom_call.1} parent=0
    _
  %s8 = ssub.s32 1, %s6
  %s9 = scalar_select 0, %s8, %s6
  $region1: #{tpu_custom_call.1} parent=0
    #allocation3 [shape = 'u8[4096]{0}', space=vmem, size = 0x1000, scoped, tag = 'input window, operand 0, single buffered']
    #allocation4 [shape = 's32[1]{0}', space=sflag, size = 0x4, scoped, tag = 'scoped memory for tpu_custom_call.1']
    #allocation5 [shape = 's32[1]{0}', space=sflag, size = 0x4, scoped, tag = 'scoped memory for tpu_custom_call.1']
    #allocation6 [shape = 'u8[32768]{0}', space=vmem, size = 0x8000, scoped, tag = 'input window, operand 1, single buffered']
    #allocation7 [shape = 's32[1]{0}', space=sflag, size = 0x4, scoped, tag = 'scoped memory for tpu_custom_call.1']
    #allocation8 [shape = 'u8[32768]{0}', space=vmem, size = 0x8000, scoped, tag = 'input window, operand 3, single buffered']
    #allocation9 [shape = 'u8[8192]{0}', space=vmem, size = 0x2000, scoped, tag = 'output window, operand 0, single buffered']
    %10 = vsyncpa [#allocation4], 0
    %11 = vsyncpa [#allocation7], 0
    %12 = vsyncpa [#allocation5], 0
    // Predicated region
    $region2: #{tpu_custom_call.1} parent=1 // pred_check
      _
    $region3: #{tpu_custom_call.1} parent=1 // pred_check_branch
      %14 = sbr.rel (0) target = $region5
    $region4: #{tpu_custom_call.1} parent=1 // pred_region
      %s16 = ssub.s32 128, 128
      %17 = vsyncadd [#allocation4], %s16
      %s18 = sshll.u32 [#allocation3], 4
      %s19 = int_to_ptr.vmem [resolvable:$true] %s18
      %24 = dma.hbm_to_vmem [thread:$0]  %s0, 128, %s19, [#allocation4], 64, 64, 4
    $region5: #{tpu_custom_call.1} parent=1 // pred_fallthru
      _
    // Predicated region
    $region6: #{tpu_custom_call.1} parent=1 // pred_check
      _
    $region7: #{tpu_custom_call.1} parent=1 // pred_check_branch
      %26 = sbr.rel (0) target = $region9
    $region8: #{tpu_custom_call.1} parent=1 // pred_region
      %s28 = ssub.s32 1024, 1024
      %29 = vsyncadd [#allocation7], %s28
      %s30 = sshll.u32 [#allocation6], 4
      %s31 = int_to_ptr.vmem [resolvable:$true] %s30
      %36 = dma.hbm_to_vmem [thread:$0]  %s1, 1024, %s31, [#allocation7], 64, 64, 4
    $region9: #{tpu_custom_call.1} parent=1 // pred_fallthru
      _
    // Predicated region
    $region10: #{tpu_custom_call.1} parent=1 // pred_check
      _
    $region11: #{tpu_custom_call.1} parent=1 // pred_check_branch
      %38 = sbr.rel (0) target = $region13
    $region12: #{tpu_custom_call.1} parent=1 // pred_region
      _
    $region13: #{tpu_custom_call.1} parent=1 // pred_fallthru
      _
    // Predicated region
    $region14: #{tpu_custom_call.1} parent=1 // pred_check
      _
    $region15: #{tpu_custom_call.1} parent=1 // pred_check_branch
      %40 = sbr.rel (0) target = $region17
    $region16: #{tpu_custom_call.1} parent=1 // pred_region
      %s42 = ssub.s32 1024, 1024
      %43 = vsyncadd [#allocation7], %s42
      %s44 = sshll.u32 [#allocation8], 4
      %s45 = int_to_ptr.vmem [resolvable:$true] %s44
      %50 = dma.hbm_to_vmem [thread:$0]  %s3, 1024, %s45, [#allocation7], 64, 64, 4
    $region17: #{tpu_custom_call.1} parent=1 // pred_fallthru
      _
    // Predicated region
    $region18: #{tpu_custom_call.1} parent=1 // pred_check
      _
    $region19: #{tpu_custom_call.1} parent=1 // pred_check_branch
      %52 = sbr.rel (0) target = $region21
    $region20: #{tpu_custom_call.1} parent=1 // pred_region
      _
    $region21: #{tpu_custom_call.1} parent=1 // pred_fallthru
      _
    // Predicated region
    $region22: #{tpu_custom_call.1} parent=1 // pred_check
      _
    $region23: #{tpu_custom_call.1} parent=1 // pred_check_branch
      %54 = sbr.rel (0) target = $region25
    $region24: #{tpu_custom_call.1} parent=1 // pred_region
      %55 = dma.done [#allocation4], 128
    $region25: #{tpu_custom_call.1} parent=1 // pred_fallthru
      _
    // Predicated region
    $region26: #{tpu_custom_call.1} parent=1 // pred_check
      _
    $region27: #{tpu_custom_call.1} parent=1 // pred_check_branch
      %57 = sbr.rel (0) target = $region29
    $region28: #{tpu_custom_call.1} parent=1 // pred_region
      %58 = dma.done [#allocation7], 1024
    $region29: #{tpu_custom_call.1} parent=1 // pred_fallthru
      _
    // Predicated region
    $region30: #{tpu_custom_call.1} parent=1 // pred_check
      _
    $region31: #{tpu_custom_call.1} parent=1 // pred_check_branch
      %60 = sbr.rel (0) target = $region33
    $region32: #{tpu_custom_call.1} parent=1 // pred_region
      %61 = dma.done [#allocation7], 1024
    $region33: #{tpu_custom_call.1} parent=1 // pred_fallthru
      _
    %p63 = scmp.eq.s32.totalorder 0, 0
    // Predicated region
    $region34: #{tpu_custom_call.1} parent=1 // pred_check
      %p64 = pneg %p63
    $region35: #{tpu_custom_call.1} parent=1 // pred_check_branch
      %66 = sbr.rel (%p64) target = $region37
    $region36: #{tpu_custom_call.1} parent=1 // pred_region
      %v67 = vld [vmem:[%s4] sm:$0x1]
      %v69 = vlaneseq
      %v70 = vshrl.u32 %v69, 7
      %v71 = vsub.s32 0, %v70
      %v72 = vrot.slane %v67, %v71
      %74 = vst [vmem:[#allocation2] sm:$0xff] %v72
      %75 = vst [vmem:[#allocation2 + $0x8] sm:$0xff] %v72
    $region37: #{tpu_custom_call.1} parent=1 // pred_fallthru
      _
    %v76 = vld [vmem:[#allocation3] sm:$0xf]
    %v77 = vld [vmem:[#allocation3 + $0x4] sm:$0xf]
    %v78 = vld [vmem:[#allocation6] sm:$0xf]
    %v79 = vld [vmem:[#allocation6 + $0x4] sm:$0xf]
    %v80 = vld [vmem:[#allocation6 + $0x8] sm:$0xf]
    %v81 = vld [vmem:[#allocation6 + $0xc] sm:$0xf]
    %v82 = vld [vmem:[#allocation6 + $0x10] sm:$0xf]
    %v83 = vld [vmem:[#allocation6 + $0x14] sm:$0xf]
    %v84 = vld [vmem:[#allocation6 + $0x18] sm:$0xf]
    %v85 = vld [vmem:[#allocation6 + $0x1c] sm:$0xf]
    %v86 = vld [vmem:[#allocation6 + $0x20] sm:$0xf]
    %v87 = vld [vmem:[#allocation6 + $0x24] sm:$0xf]
    %v88 = vld [vmem:[#allocation6 + $0x28] sm:$0xf]
    %v89 = vld [vmem:[#allocation6 + $0x2c] sm:$0xf]
    %v90 = vld [vmem:[#allocation6 + $0x30] sm:$0xf]
    %v91 = vld [vmem:[#allocation6 + $0x34] sm:$0xf]
    %v92 = vld [vmem:[#allocation6 + $0x38] sm:$0xf]
    %v93 = vld [vmem:[#allocation6 + $0x3c] sm:$0xf]
    %v94 = vld [vmem:[%s2] sm:$0x1]
    %v96 = vlaneseq
    %v97 = vshrl.u32 %v96, 7
    %v98 = vsub.s32 0, %v97
    %v99 = vrot.slane %v94, %v98
    %v103 = vunpack.c.l.b16 %v76
    %v104 = vunpack.c.l.b16 %v77
    %v105 = vpack.c.b16 %v104, %v103
    %v123 = vunpack.c.l.b16 %v78
    %v124 = vunpack.c.l.b16 %v79
    %v125 = vunpack.c.l.b16 %v80
    %v126 = vunpack.c.l.b16 %v81
    %v127 = vunpack.c.l.b16 %v82
    %v128 = vunpack.c.l.b16 %v83
    %v129 = vunpack.c.l.b16 %v84
    %v130 = vunpack.c.l.b16 %v85
    %v131 = vunpack.c.l.b16 %v86
    %v132 = vunpack.c.l.b16 %v87
    %v133 = vunpack.c.l.b16 %v88
    %v134 = vunpack.c.l.b16 %v89
    %v135 = vunpack.c.l.b16 %v90
    %v136 = vunpack.c.l.b16 %v91
    %v137 = vunpack.c.l.b16 %v92
    %v138 = vunpack.c.l.b16 %v93
    %v139 = vpack.c.b16 %v124, %v123
    %v140 = vpack.c.b16 %v126, %v125
    %v141 = vpack.c.b16 %v128, %v127
    %v142 = vpack.c.b16 %v130, %v129
    %v143 = vpack.c.b16 %v132, %v131
    %v144 = vpack.c.b16 %v134, %v133
    %v145 = vpack.c.b16 %v136, %v135
    %v146 = vpack.c.b16 %v138, %v137
    %155 = vmatprep.subr.bf16.mxu0 0
    %156 = vmatpush1.bf16.msra.mxu0 %v139
    %157 = vmatprep.subr.bf16.mxu0 0
    %158 = vmatpush1.bf16.msra.mxu0 %v140
    %159 = vmatprep.subr.bf16.mxu0 0
    %160 = vmatpush1.bf16.msra.mxu0 %v141
    %161 = vmatprep.subr.bf16.mxu0 0
    %162 = vmatpush1.bf16.msra.mxu0 %v142
    %163 = vmatprep.subr.bf16.mxu0 0
    %164 = vmatpush1.bf16.msra.mxu0 %v143
    %165 = vmatprep.subr.bf16.mxu0 0
    %166 = vmatpush1.bf16.msra.mxu0 %v144
    %167 = vmatprep.subr.bf16.mxu0 0
    %168 = vmatpush1.bf16.msra.mxu0 %v145
    %169 = vmatprep.subr.bf16.mxu0 0
    %170 = vmatpush1.bf16.msra.mxu0 %v146
    %171 = vmatprep.subr.bf16.mxu0 0
    %172 = vmatpush1.bf16.msra.mxu0 0
    %173 = vmatprep.subr.bf16.mxu0 0
    %174 = vmatpush1.bf16.msra.mxu0 0
    %175 = vmatprep.subr.bf16.mxu0 0
    %176 = vmatpush1.bf16.msra.mxu0 0
    %177 = vmatprep.subr.bf16.mxu0 0
    %178 = vmatpush1.bf16.msra.mxu0 0
    %179 = vmatprep.subr.bf16.mxu0 0
    %180 = vmatpush1.bf16.msra.mxu0 0
    %181 = vmatprep.subr.bf16.mxu0 0
    %182 = vmatpush1.bf16.msra.mxu0 0
    %183 = vmatprep.subr.bf16.mxu0 0
    %184 = vmatpush1.bf16.msra.mxu0 0
    %185 = vmatprep.subr.bf16.mxu0 0
    %186 = vmatpush1.bf16.msra.mxu0 0
    %187 = vmatprep.mubr.bf16.mxu0 0
    %188 = vmatmul.mubr.bf16.gmra.mrb[0].mxu0 %v105
    %v189 = vpop.f32.mrb[0].mxu0
    %v190 = vadd.f32 %v99, %v189
    %v191 = vpop.f32.mrb[0].mxu0
    %v192 = vpop.f32.mrb[0].mxu0
    %v193 = vadd.f32 %v99, %v192
    %v194 = vpop.f32.mrb[0].mxu0
    %195 = vdwg.mxu0
    %v196 = vmul.f32 %v190, 0.5
    %v197 = vmul.f32 %v193, 0.5
    %v198 = vrcp.pop 1.4142135
    %v199 = vmul.f32 %v190, %v198
    %v200 = vmul.f32 %v193, %v198
    %v201 = verf.f32.pop %v199
    %v202 = verf.f32.pop %v200
    %v203 = vadd.f32 %v201, 1.0
    %v204 = vadd.f32 %v202, 1.0
    %v205 = vmul.f32 %v196, %v203
    %v206 = vmul.f32 %v197, %v204
    %v207 = vld [vmem:[#allocation2] sm:$0xff]
    %v208 = vld [vmem:[#allocation2 + $0x8] sm:$0xff]
    %v209 = vpack.c.bf16 %v206, %v205
    %v210 = vld [vmem:[#allocation8] sm:$0xf]
    %v211 = vld [vmem:[#allocation8 + $0x4] sm:$0xf]
    %v212 = vld [vmem:[#allocation8 + $0x8] sm:$0xf]
    %v213 = vld [vmem:[#allocation8 + $0xc] sm:$0xf]
    %v214 = vld [vmem:[#allocation8 + $0x10] sm:$0xf]
    %v215 = vld [vmem:[#allocation8 + $0x14] sm:$0xf]
    %v216 = vld [vmem:[#allocation8 + $0x18] sm:$0xf]
    %v217 = vld [vmem:[#allocation8 + $0x1c] sm:$0xf]
    %v218 = vld [vmem:[#allocation8 + $0x20] sm:$0xf]
    %v219 = vld [vmem:[#allocation8 + $0x24] sm:$0xf]
    %v220 = vld [vmem:[#allocation8 + $0x28] sm:$0xf]
    %v221 = vld [vmem:[#allocation8 + $0x2c] sm:$0xf]
    %v222 = vld [vmem:[#allocation8 + $0x30] sm:$0xf]
    %v223 = vld [vmem:[#allocation8 + $0x34] sm:$0xf]
    %v224 = vld [vmem:[#allocation8 + $0x38] sm:$0xf]
    %v225 = vld [vmem:[#allocation8 + $0x3c] sm:$0xf]
    %v242 = vunpack.c.l.b16 %v210
    %v243 = vunpack.c.l.b16 %v211
    %v244 = vunpack.c.l.b16 %v212
    %v245 = vunpack.c.l.b16 %v213
    %v246 = vunpack.c.l.b16 %v214
    %v247 = vunpack.c.l.b16 %v215
    %v248 = vunpack.c.l.b16 %v216
    %v249 = vunpack.c.l.b16 %v217
    %v250 = vunpack.c.l.b16 %v218
    %v251 = vunpack.c.l.b16 %v219
    %v252 = vunpack.c.l.b16 %v220
    %v253 = vunpack.c.l.b16 %v221
    %v254 = vunpack.c.l.b16 %v222
    %v255 = vunpack.c.l.b16 %v223
    %v256 = vunpack.c.l.b16 %v224
    %v257 = vunpack.c.l.b16 %v225
    %v258 = vpack.c.b16 %v243, %v242
    %v259 = vpack.c.b16 %v245, %v244
    %v260 = vpack.c.b16 %v247, %v246
    %v261 = vpack.c.b16 %v249, %v248
    %v262 = vpack.c.b16 %v251, %v250
    %v263 = vpack.c.b16 %v253, %v252
    %v264 = vpack.c.b16 %v255, %v254
    %v265 = vpack.c.b16 %v257, %v256
    %274 = vmatprep.subr.bf16.mxu0 0
    %275 = vmatpush1.bf16.msra.mxu0 %v258
    %276 = vmatprep.subr.bf16.mxu0 0
    %277 = vmatpush1.bf16.msra.mxu0 %v259
    %278 = vmatprep.subr.bf16.mxu0 0
    %279 = vmatpush1.bf16.msra.mxu0 %v260
    %280 = vmatprep.subr.bf16.mxu0 0
    %281 = vmatpush1.bf16.msra.mxu0 %v261
    %282 = vmatprep.subr.bf16.mxu0 0
    %283 = vmatpush1.bf16.msra.mxu0 %v262
    %284 = vmatprep.subr.bf16.mxu0 0
    %285 = vmatpush1.bf16.msra.mxu0 %v263
    %286 = vmatprep.subr.bf16.mxu0 0
    %287 = vmatpush1.bf16.msra.mxu0 %v264
    %288 = vmatprep.subr.bf16.mxu0 0
    %289 = vmatpush1.bf16.msra.mxu0 %v265
    %290 = vmatprep.subr.bf16.mxu0 0
    %291 = vmatpush1.bf16.msra.mxu0 0
    %292 = vmatprep.subr.bf16.mxu0 0
    %293 = vmatpush1.bf16.msra.mxu0 0
    %294 = vmatprep.subr.bf16.mxu0 0
    %295 = vmatpush1.bf16.msra.mxu0 0
    %296 = vmatprep.subr.bf16.mxu0 0
    %297 = vmatpush1.bf16.msra.mxu0 0
    %298 = vmatprep.subr.bf16.mxu0 0
    %299 = vmatpush1.bf16.msra.mxu0 0
    %300 = vmatprep.subr.bf16.mxu0 0
    %301 = vmatpush1.bf16.msra.mxu0 0
    %302 = vmatprep.subr.bf16.mxu0 0
    %303 = vmatpush1.bf16.msra.mxu0 0
    %304 = vmatprep.subr.bf16.mxu0 0
    %305 = vmatpush1.bf16.msra.mxu0 0
    %306 = vmatprep.mubr.bf16.mxu0 0
    %307 = vmatmul.mubr.bf16.gmra.mrb[0].mxu0 %v209
    %v308 = vpop.f32.mrb[0].mxu0
    %v309 = vadd.f32 0.0, %v308
    %v310 = vpop.f32.mrb[0].mxu0
    %v311 = vpop.f32.mrb[0].mxu0
    %v312 = vadd.f32 0.0, %v311
    %v313 = vpop.f32.mrb[0].mxu0
    %314 = vdwg.mxu0
    %v315 = vadd.f32 %v207, %v309
    %v316 = vadd.f32 %v208, %v312
    %317 = vst [vmem:[#allocation2] sm:$0xff] %v315
    %318 = vst [vmem:[#allocation2 + $0x8] sm:$0xff] %v316
    // Predicated region
    $region38: #{tpu_custom_call.1} parent=1 // pred_check
      %p319 = pneg %p63
    $region39: #{tpu_custom_call.1} parent=1 // pred_check_branch
      %321 = sbr.rel (%p319) target = $region41
    $region40: #{tpu_custom_call.1} parent=1 // pred_region
      %v322 = vld [vmem:[#allocation2] sm:$0xff]
      %v323 = vld [vmem:[#allocation2 + $0x8] sm:$0xff]
      %324 = vst [vmem:[#allocation9] sm:$0xff] %v322
      %325 = vst [vmem:[#allocation9 + $0x8] sm:$0xff] %v323
    $region41: #{tpu_custom_call.1} parent=1 // pred_fallthru
      _
    // Predicated region
    $region42: #{tpu_custom_call.1} parent=1 // pred_check
      _
    $region43: #{tpu_custom_call.1} parent=1 // pred_check_branch
      %327 = sbr.rel (0) target = $region45
    $region44: #{tpu_custom_call.1} parent=1 // pred_region
      %s329 = ssub.s32 256, 256
      %330 = vsyncadd [#allocation5], %s329
      %s331 = sshll.u32 [#allocation9], 4
      %s332 = int_to_ptr.vmem [resolvable:$true] %s331
      %337 = dma.vmem_to_hbm [thread:$0]  %s332, 256, %s5, [#allocation5], 128, 128, 8
    $region45: #{tpu_custom_call.1} parent=1 // pred_fallthru
      _
    // Predicated region
    $region46: #{tpu_custom_call.1} parent=1 // pred_check
      _
    $region47: #{tpu_custom_call.1} parent=1 // pred_check_branch
      %339 = sbr.rel (0) target = $region49
    $region48: #{tpu_custom_call.1} parent=1 // pred_region
      %340 = dma.done [#allocation5], 256
    $region49: #{tpu_custom_call.1} parent=1 // pred_fallthru
      _
    %341 = vsyncpa [#allocation4], 1
    %342 = vsyncpa [#allocation7], 1
    %343 = vsyncpa [#allocation5], 1

</llo_original>
